<compile_context>
chip_gen: v7x
topology: tpu7x:2x2x1
jax: 0.10.0
libtpu: 0.0.40
codegen_flags: <defaults>
</compile_context>

<pallas_src>
import jax
import jax.numpy as jnp
from jax import lax
from jax.experimental import pallas as pl
from jax.experimental.pallas import tpu as pltpu

_LANES = 128
_THR_ROWS = 8                       # 8 x 128 = 1024 thresholds per grid step
_THR_CHUNK = _THR_ROWS * _LANES
_MAX_BLOCK_ROWS = 512               # up to 256 KiB of f32 data per input per grid step


def _cdf_count_kernel(thr_ref, p_ref, t_ref, cnt_p_ref, cnt_t_ref):
    """Per-(block, chunk) counts: cnt[r, l] = #{block elements <= thr[r, l]}."""
    thr = thr_ref[...]                       # (8, 128) f32 thresholds (resident)
    sub_tiles = p_ref.shape[0] // 8          # static python int

    def outer(i, carry):
        acc_p, acc_t = carry
        base = pl.multiple_of(i * 8, 8)
        # Cast in-kernel so bf16/fp16 inputs stream at native width over HBM.
        dp = p_ref[pl.ds(base, 8), :].astype(jnp.float32)   # (8, 128)
        dt = t_ref[pl.ds(base, 8), :].astype(jnp.float32)

        def inner(_, c):
            a_p, a_t, dp_s, dt_s = c
            # All-pairs compare of the 1024 data values in this sub-tile against
            # the 1024 thresholds: 8 static sublane rotations x 128 lane
            # rotations cover every (data, threshold) pair exactly once.
            for q in range(8):               # static unroll (ILP for the LLO)
                rp = dp_s if q == 0 else pltpu.roll(dp_s, q, axis=0)
                rt = dt_s if q == 0 else pltpu.roll(dt_s, q, axis=0)
                a_p = a_p + (rp <= thr).astype(jnp.float32)
                a_t = a_t + (rt <= thr).astype(jnp.float32)
            dp_s = pltpu.roll(dp_s, 1, axis=1)   # advance lane shift by 1
            dt_s = pltpu.roll(dt_s, 1, axis=1)
            return a_p, a_t, dp_s, dt_s

        acc_p, acc_t, _, _ = lax.fori_loop(0, _LANES, inner, (acc_p, acc_t, dp, dt))
        return acc_p, acc_t

    zeros = jnp.zeros((_THR_ROWS, _LANES), jnp.float32)
    acc_p, acc_t = lax.fori_loop(0, sub_tiles, outer, (zeros, zeros))
    cnt_p_ref[...] = acc_p                   # (8, 128) lane-dense partial counts
    cnt_t_ref[...] = acc_t


def crps(prediction, target, integral_number: int = 1000):
    p = jnp.ravel(prediction)
    t = jnp.ravel(target)
    n = p.size
    assert t.size == n, "prediction/target must have the same numel"

    # TODO(synk): the global min/max reduction, linspace threshold construction
    # and the final O(K) trapezoid integration stay in plain JAX glue; the
    # dominant O(n*K) empirical-CDF evaluation runs in the Pallas kernel.
    lo = jnp.minimum(jnp.min(p), jnp.min(t)).astype(jnp.float32)
    hi = jnp.maximum(jnp.max(p), jnp.max(t)).astype(jnp.float32)
    x = jnp.linspace(lo, hi, integral_number, dtype=jnp.float32)

    # Data layout: pad with +inf (never <= any finite threshold -> contributes 0)
    # and reshape lane-major to (rows, 128).
    rows = -(-n // _LANES)
    block_rows = min(_MAX_BLOCK_ROWS, ((rows + 7) // 8) * 8)
    total_rows = -(-rows // block_rows) * block_rows
    pad = total_rows * _LANES - n
    p2 = jnp.pad(p, (0, pad), constant_values=jnp.inf).reshape(total_rows, _LANES)
    t2 = jnp.pad(t, (0, pad), constant_values=jnp.inf).reshape(total_rows, _LANES)
    num_blocks = total_rows // block_rows

    # Threshold layout: pad to a multiple of 1024 (padded counts are discarded).
    num_chunks = -(-integral_number // _THR_CHUNK)
    thr = jnp.pad(x, (0, num_chunks * _THR_CHUNK - integral_number))
    thr = thr.reshape(num_chunks * _THR_ROWS, _LANES)

    cnt_p, cnt_t = pl.pallas_call(
        _cdf_count_kernel,
        out_shape=(
            jax.ShapeDtypeStruct((num_blocks, num_chunks, _THR_ROWS, _LANES), jnp.float32),
            jax.ShapeDtypeStruct((num_blocks, num_chunks, _THR_ROWS, _LANES), jnp.float32),
        ),
        grid_spec=pltpu.PrefetchScalarGridSpec(
            num_scalar_prefetch=0,
            # Threshold chunk is the inner (fastest) axis: the (block_rows, 128)
            # data block index is unchanged across it, so it stays VMEM-resident
            # while only the tiny 4 KiB threshold tile is re-fetched.
            grid=(num_blocks, num_chunks),
            in_specs=[
                pl.BlockSpec((_THR_ROWS, _LANES), lambda i, j: (j, 0)),     # thresholds
                pl.BlockSpec((block_rows, _LANES), lambda i, j: (i, 0)),    # prediction
                pl.BlockSpec((block_rows, _LANES), lambda i, j: (i, 0)),    # target
            ],
            out_specs=(
                pl.BlockSpec((None, None, _THR_ROWS, _LANES), lambda i, j: (i, j, 0, 0)),
                pl.BlockSpec((None, None, _THR_ROWS, _LANES), lambda i, j: (i, j, 0, 0)),
            ),
        ),
        compiler_params=pltpu.CompilerParams(
            # Each (block, chunk) grid point writes an independent output slab.
            dimension_semantics=("parallel", "parallel"),
        ),
    )(thr, p2, t2)

    # Reduce the per-block partial counts (a handful of (8,128) slabs) in glue.
    cdf_p = cnt_p.sum(axis=0).reshape(-1)[:integral_number] / n
    cdf_t = cnt_t.sum(axis=0).reshape(-1)[:integral_number] / n

    y = jnp.abs(cdf_p - cdf_t) ** 2
    # trapz(y, x) with explicit x spacing (matches torch.trapz).
    return jnp.sum(0.5 * (y[1:] + y[:-1]) * (x[1:] - x[:-1]))


def _crps_reference(prediction, target, integral_number: int = 1000):
    """Pure-JAX mirror of the PyTorch CRPS.forward (verification only)."""
    p = jnp.ravel(prediction)
    t = jnp.ravel(target)
    lo = jnp.minimum(jnp.min(p), jnp.min(t)).astype(jnp.float32)
    hi = jnp.maximum(jnp.max(p), jnp.max(t)).astype(jnp.float32)
    x = jnp.linspace(lo, hi, integral_number, dtype=jnp.float32)
    cdf_p = jnp.mean((p[None, :] <= x[:, None]).astype(jnp.float32), axis=1)
    cdf_t = jnp.mean((t[None, :] <= x[:, None]).astype(jnp.float32), axis=1)
    y = jnp.abs(cdf_p - cdf_t) ** 2
    return jnp.sum(0.5 * (y[1:] + y[:-1]) * (x[1:] - x[:-1]))


if __name__ == "__main__":
    key = jax.random.PRNGKey(0)
    k1, k2 = jax.random.split(key)

    prediction = jax.random.normal(k1, (2, 4, 16, 16), dtype=jnp.float32)
    target = jax.random.normal(k2, (2, 4, 16, 16), dtype=jnp.float32)

    loss = crps(prediction, target)
    loss = jax.block_until_ready(loss)

    ref = _crps_reference(prediction, target)
    assert jnp.allclose(loss, ref, rtol=1e-5, atol=1e-6), (loss, ref)
    print("KERNEL_OK")
</pallas_src>

<mosaic_0001>
module attributes {stable_mosaic.version = 11 : i64} {
  func.func @_cdf_count_kernel(%arg0: i32, %arg1: i32, %arg2: memref<8x128xf32, #tpu.memory_space<vmem>>, %arg3: memref<16x128xf32, #tpu.memory_space<vmem>>, %arg4: memref<16x128xf32, #tpu.memory_space<vmem>>, %arg5: memref<1x1x8x128xf32, #tpu.memory_space<vmem>>, %arg6: memref<1x1x8x128xf32, #tpu.memory_space<vmem>>) attributes {dimension_semantics = [#tpu.dimension_semantics<parallel>, #tpu.dimension_semantics<parallel>], iteration_bounds = array<i64: 1, 1>, scalar_prefetch = 0 : i64, scratch_operands = 0 : i64, tpu.core_type = #tpu.core_type<tc>, window_params = [{transform_indices = @transform_0, window_bounds = array<i64: 8, 128>}, {transform_indices = @transform_1, window_bounds = array<i64: 16, 128>}, {transform_indices = @transform_2, window_bounds = array<i64: 16, 128>}, {transform_indices = @transform_3, window_bounds = array<i64: 1, 1, 8, 128>}, {transform_indices = @transform_4, window_bounds = array<i64: 1, 1, 8, 128>}]} {
    %c0 = arith.constant 0 : index
    %c0_0 = arith.constant 0 : index
    %0 = vector.load %arg2[%c0, %c0_0] : memref<8x128xf32, #tpu.memory_space<vmem>>, vector<8x128xf32>
    %cst = arith.constant 0.000000e+00 : f32
    %1 = vector.broadcast %cst : f32 to vector<8x128xf32>
    %c0_i32 = arith.constant 0 : i32
    %c2_i32 = arith.constant 2 : i32
    %2 = arith.addi %c0_i32, %c2_i32 : i32
    %c1_i32 = arith.constant 1 : i32
    %3:2 = scf.for %arg7 = %c0_i32 to %2 step %c1_i32 iter_args(%arg8 = %1, %arg9 = %1) -> (vector<8x128xf32>, vector<8x128xf32>)  : i32 {
      %c8_i32 = arith.constant 8 : i32
      %10 = arith.muli %arg7, %c8_i32 : i32
      %11 = tpu.assume_multiple %10, 8 : i32
      %12 = arith.index_cast %11 : i32 to index
      %c0_10 = arith.constant 0 : index
      %13 = vector.load %arg3[%12, %c0_10] : memref<16x128xf32, #tpu.memory_space<vmem>>, vector<8x128xf32>
      %14 = arith.index_cast %11 : i32 to index
      %c0_11 = arith.constant 0 : index
      %15 = vector.load %arg4[%14, %c0_11] : memref<16x128xf32, #tpu.memory_space<vmem>>, vector<8x128xf32>
      %c0_i32_12 = arith.constant 0 : i32
      %c128_i32 = arith.constant 128 : i32
      %16 = arith.addi %c0_i32_12, %c128_i32 : i32
      %c1_i32_13 = arith.constant 1 : i32
      %17:4 = scf.for %arg10 = %c0_i32_12 to %16 step %c1_i32_13 iter_args(%arg11 = %arg8, %arg12 = %arg9, %arg13 = %13, %arg14 = %15) -> (vector<8x128xf32>, vector<8x128xf32>, vector<8x128xf32>, vector<8x128xf32>)  : i32 {
        %18 = arith.cmpf ole, %arg13, %0 : vector<8x128xf32>
        %19 = arith.extui %18 : vector<8x128xi1> to vector<8x128xi32>
        %20 = arith.sitofp %19 : vector<8x128xi32> to vector<8x128xf32>
        %21 = arith.addf %arg11, %20 : vector<8x128xf32>
        %22 = arith.cmpf ole, %arg14, %0 : vector<8x128xf32>
        %23 = arith.extui %22 : vector<8x128xi1> to vector<8x128xi32>
        %24 = arith.sitofp %23 : vector<8x128xi32> to vector<8x128xf32>
        %25 = arith.addf %arg12, %24 : vector<8x128xf32>
        %c1_i32_14 = arith.constant 1 : i32
        %26 = tpu.dynamic_rotate %arg13 by %c1_i32_14 dim 0 : vector<8x128xf32>, i32 -> vector<8x128xf32>
        %c1_i32_15 = arith.constant 1 : i32
        %27 = tpu.dynamic_rotate %arg14 by %c1_i32_15 dim 0 : vector<8x128xf32>, i32 -> vector<8x128xf32>
        %28 = arith.cmpf ole, %26, %0 : vector<8x128xf32>
        %29 = arith.extui %28 : vector<8x128xi1> to vector<8x128xi32>
        %30 = arith.sitofp %29 : vector<8x128xi32> to vector<8x128xf32>
        %31 = arith.addf %21, %30 : vector<8x128xf32>
        %32 = arith.cmpf ole, %27, %0 : vector<8x128xf32>
        %33 = arith.extui %32 : vector<8x128xi1> to vector<8x128xi32>
        %34 = arith.sitofp %33 : vector<8x128xi32> to vector<8x128xf32>
        %35 = arith.addf %25, %34 : vector<8x128xf32>
        %c2_i32_16 = arith.constant 2 : i32
        %36 = tpu.dynamic_rotate %arg13 by %c2_i32_16 dim 0 : vector<8x128xf32>, i32 -> vector<8x128xf32>
        %c2_i32_17 = arith.constant 2 : i32
        %37 = tpu.dynamic_rotate %arg14 by %c2_i32_17 dim 0 : vector<8x128xf32>, i32 -> vector<8x128xf32>
        %38 = arith.cmpf ole, %36, %0 : vector<8x128xf32>
        %39 = arith.extui %38 : vector<8x128xi1> to vector<8x128xi32>
        %40 = arith.sitofp %39 : vector<8x128xi32> to vector<8x128xf32>
        %41 = arith.addf %31, %40 : vector<8x128xf32>
        %42 = arith.cmpf ole, %37, %0 : vector<8x128xf32>
        %43 = arith.extui %42 : vector<8x128xi1> to vector<8x128xi32>
        %44 = arith.sitofp %43 : vector<8x128xi32> to vector<8x128xf32>
        %45 = arith.addf %35, %44 : vector<8x128xf32>
        %c3_i32 = arith.constant 3 : i32
        %46 = tpu.dynamic_rotate %arg13 by %c3_i32 dim 0 : vector<8x128xf32>, i32 -> vector<8x128xf32>
        %c3_i32_18 = arith.constant 3 : i32
        %47 = tpu.dynamic_rotate %arg14 by %c3_i32_18 dim 0 : vector<8x128xf32>, i32 -> vector<8x128xf32>
        %48 = arith.cmpf ole, %46, %0 : vector<8x128xf32>
        %49 = arith.extui %48 : vector<8x128xi1> to vector<8x128xi32>
        %50 = arith.sitofp %49 : vector<8x128xi32> to vector<8x128xf32>
        %51 = arith.addf %41, %50 : vector<8x128xf32>
        %52 = arith.cmpf ole, %47, %0 : vector<8x128xf32>
        %53 = arith.extui %52 : vector<8x128xi1> to vector<8x128xi32>
        %54 = arith.sitofp %53 : vector<8x128xi32> to vector<8x128xf32>
        %55 = arith.addf %45, %54 : vector<8x128xf32>
        %c4_i32 = arith.constant 4 : i32
        %56 = tpu.dynamic_rotate %arg13 by %c4_i32 dim 0 : vector<8x128xf32>, i32 -> vector<8x128xf32>
        %c4_i32_19 = arith.constant 4 : i32
        %57 = tpu.dynamic_rotate %arg14 by %c4_i32_19 dim 0 : vector<8x128xf32>, i32 -> vector<8x128xf32>
        %58 = arith.cmpf ole, %56, %0 : vector<8x128xf32>
        %59 = arith.extui %58 : vector<8x128xi1> to vector<8x128xi32>
        %60 = arith.sitofp %59 : vector<8x128xi32> to vector<8x128xf32>
        %61 = arith.addf %51, %60 : vector<8x128xf32>
        %62 = arith.cmpf ole, %57, %0 : vector<8x128xf32>
        %63 = arith.extui %62 : vector<8x128xi1> to vector<8x128xi32>
        %64 = arith.sitofp %63 : vector<8x128xi32> to vector<8x128xf32>
        %65 = arith.addf %55, %64 : vector<8x128xf32>
        %c5_i32 = arith.constant 5 : i32
        %66 = tpu.dynamic_rotate %arg13 by %c5_i32 dim 0 : vector<8x128xf32>, i32 -> vector<8x128xf32>
        %c5_i32_20 = arith.constant 5 : i32
        %67 = tpu.dynamic_rotate %arg14 by %c5_i32_20 dim 0 : vector<8x128xf32>, i32 -> vector<8x128xf32>
        %68 = arith.cmpf ole, %66, %0 : vector<8x128xf32>
        %69 = arith.extui %68 : vector<8x128xi1> to vector<8x128xi32>
        %70 = arith.sitofp %69 : vector<8x128xi32> to vector<8x128xf32>
        %71 = arith.addf %61, %70 : vector<8x128xf32>
        %72 = arith.cmpf ole, %67, %0 : vector<8x128xf32>
        %73 = arith.extui %72 : vector<8x128xi1> to vector<8x128xi32>
        %74 = arith.sitofp %73 : vector<8x128xi32> to vector<8x128xf32>
        %75 = arith.addf %65, %74 : vector<8x128xf32>
        %c6_i32 = arith.constant 6 : i32
        %76 = tpu.dynamic_rotate %arg13 by %c6_i32 dim 0 : vector<8x128xf32>, i32 -> vector<8x128xf32>
        %c6_i32_21 = arith.constant 6 : i32
        %77 = tpu.dynamic_rotate %arg14 by %c6_i32_21 dim 0 : vector<8x128xf32>, i32 -> vector<8x128xf32>
        %78 = arith.cmpf ole, %76, %0 : vector<8x128xf32>
        %79 = arith.extui %78 : vector<8x128xi1> to vector<8x128xi32>
        %80 = arith.sitofp %79 : vector<8x128xi32> to vector<8x128xf32>
        %81 = arith.addf %71, %80 : vector<8x128xf32>
        %82 = arith.cmpf ole, %77, %0 : vector<8x128xf32>
        %83 = arith.extui %82 : vector<8x128xi1> to vector<8x128xi32>
        %84 = arith.sitofp %83 : vector<8x128xi32> to vector<8x128xf32>
        %85 = arith.addf %75, %84 : vector<8x128xf32>
        %c7_i32 = arith.constant 7 : i32
        %86 = tpu.dynamic_rotate %arg13 by %c7_i32 dim 0 : vector<8x128xf32>, i32 -> vector<8x128xf32>
        %c7_i32_22 = arith.constant 7 : i32
        %87 = tpu.dynamic_rotate %arg14 by %c7_i32_22 dim 0 : vector<8x128xf32>, i32 -> vector<8x128xf32>
        %88 = arith.cmpf ole, %86, %0 : vector<8x128xf32>
        %89 = arith.extui %88 : vector<8x128xi1> to vector<8x128xi32>
        %90 = arith.sitofp %89 : vector<8x128xi32> to vector<8x128xf32>
        %91 = arith.addf %81, %90 : vector<8x128xf32>
        %92 = arith.cmpf ole, %87, %0 : vector<8x128xf32>
        %93 = arith.extui %92 : vector<8x128xi1> to vector<8x128xi32>
        %94 = arith.sitofp %93 : vector<8x128xi32> to vector<8x128xf32>
        %95 = arith.addf %85, %94 : vector<8x128xf32>
        %c1_i32_23 = arith.constant 1 : i32
        %96 = tpu.dynamic_rotate %arg13 by %c1_i32_23 dim 1 : vector<8x128xf32>, i32 -> vector<8x128xf32>
        %c1_i32_24 = arith.constant 1 : i32
        %97 = tpu.dynamic_rotate %arg14 by %c1_i32_24 dim 1 : vector<8x128xf32>, i32 -> vector<8x128xf32>
        scf.yield %91, %95, %96, %97 : vector<8x128xf32>, vector<8x128xf32>, vector<8x128xf32>, vector<8x128xf32>
      }
      scf.yield %17#0, %17#1 : vector<8x128xf32>, vector<8x128xf32>
    }
    %c2_i32_1 = arith.constant 2 : i32
    %c0_2 = arith.constant 0 : index
    %c0_3 = arith.constant 0 : index
    %c0_4 = arith.constant 0 : index
    %c0_5 = arith.constant 0 : index
    %4 = vector.load %arg5[%c0_2, %c0_3, %c0_4, %c0_5] : memref<1x1x8x128xf32, #tpu.memory_space<vmem>>, vector<1x1x8x128xf32>
    %5 = vector.shape_cast %4 : vector<1x1x8x128xf32> to vector<8x128xf32>
    %6 = vector.shape_cast %3#0 : vector<8x128xf32> to vector<1x1x8x128xf32>
    tpu.vector_store %arg5[%c0_2, %c0_3, %c0_4, %c0_5], %6 {strides = array<i32>} : memref<1x1x8x128xf32, #tpu.memory_space<vmem>>, vector<1x1x8x128xf32>,
    %c0_6 = arith.constant 0 : index
    %c0_7 = arith.constant 0 : index
    %c0_8 = arith.constant 0 : index
    %c0_9 = arith.constant 0 : index
    %7 = vector.load %arg6[%c0_6, %c0_7, %c0_8, %c0_9] : memref<1x1x8x128xf32, #tpu.memory_space<vmem>>, vector<1x1x8x128xf32>
    %8 = vector.shape_cast %7 : vector<1x1x8x128xf32> to vector<8x128xf32>
    %9 = vector.shape_cast %3#1 : vector<8x128xf32> to vector<1x1x8x128xf32>
    tpu.vector_store %arg6[%c0_6, %c0_7, %c0_8, %c0_9], %9 {strides = array<i32>} : memref<1x1x8x128xf32, #tpu.memory_space<vmem>>, vector<1x1x8x128xf32>,
    return
  }
  func.func @transform_0(%arg0: i32, %arg1: i32) -> (i32, i32) {
    %c0_i32 = arith.constant 0 : i32
    %c0_i32_0 = arith.constant 0 : i32
    return %arg1, %c0_i32 : i32, i32
  }
  func.func @transform_1(%arg0: i32, %arg1: i32) -> (i32, i32) {
    %c0_i32 = arith.constant 0 : i32
    %c0_i32_0 = arith.constant 0 : i32
    return %arg0, %c0_i32 : i32, i32
  }
  func.func @transform_2(%arg0: i32, %arg1: i32) -> (i32, i32) {
    %c0_i32 = arith.constant 0 : i32
    %c0_i32_0 = arith.constant 0 : i32
    return %arg0, %c0_i32 : i32, i32
  }
  func.func @transform_3(%arg0: i32, %arg1: i32) -> (i32, i32, i32, i32) {
    %c0_i32 = arith.constant 0 : i32
    %c0_i32_0 = arith.constant 0 : i32
    %c0_i32_1 = arith.constant 0 : i32
    return %arg0, %arg1, %c0_i32, %c0_i32_0 : i32, i32, i32, i32
  }
  func.func @transform_4(%arg0: i32, %arg1: i32) -> (i32, i32, i32, i32) {
    %c0_i32 = arith.constant 0 : i32
    %c0_i32_0 = arith.constant 0 : i32
    %c0_i32_1 = arith.constant 0 : i32
    return %arg0, %arg1, %c0_i32, %c0_i32_0 : i32, i32, i32, i32
  }
}

</mosaic_0001>

<llo_original>
// kernel: tpu_custom_call.1
$region0: #{tpu_custom_call.1}
  #allocation0 [shape = 'u32[]', space=smem, size = 0x4, offset = 0x4, fixed_abs, tag = 'smem constant byte address 0x4 - core index']
  #allocation1 [shape = 'u32[144,128]{1,0:T(1,128)}', space=vmem, size = 0x12000, scoped, tag = 'internal scratch']
  %s0 = inlined_call_operand.hbm [shape: f32[8,128], index: 0, kind: input, shape index: {}]
  %s1 = inlined_call_operand.hbm [shape: f32[16,128], index: 1, kind: input, shape index: {}]
  %s2 = inlined_call_operand.hbm [shape: f32[16,128], index: 2, kind: input, shape index: {}]
  %s3 = inlined_call_operand.hbm [shape: f32[1,1,8,128], index: 3, kind: output, shape index: {0}]
  %s4 = inlined_call_operand.hbm [shape: f32[1,1,8,128], index: 4, kind: output, shape index: {1}]
  %5 = xla_tuple %s3, %s4
  %s6 = sld [smem:[#allocation0]]
  $region56: #{tpu_custom_call.1} parent=0
    _
  %s8 = ssub.s32 1, %s6
  %s9 = scalar_select 0, %s8, %s6
  $region1: #{tpu_custom_call.1} parent=0
    #allocation2 [shape = 'u8[4096]{0}', space=vmem, size = 0x1000, scoped, tag = 'input window, operand 0, single buffered']
    #allocation3 [shape = 's32[1]{0}', space=sflag, size = 0x4, scoped, tag = 'scoped memory for tpu_custom_call.1']
    #allocation4 [shape = 's32[1]{0}', space=sflag, size = 0x4, scoped, tag = 'scoped memory for tpu_custom_call.1']
    #allocation5 [shape = 'u8[8192]{0}', space=vmem, size = 0x2000, scoped, tag = 'input window, operand 1, single buffered']
    #allocation6 [shape = 's32[1]{0}', space=sflag, size = 0x4, scoped, tag = 'scoped memory for tpu_custom_call.1']
    #allocation7 [shape = 'u8[8192]{0}', space=vmem, size = 0x2000, scoped, tag = 'input window, operand 2, single buffered']
    #allocation8 [shape = 'u8[4096]{0}', space=vmem, size = 0x1000, scoped, tag = 'output window, operand 0, single buffered']
    #allocation9 [shape = 'u8[4096]{0}', space=vmem, size = 0x1000, scoped, tag = 'output window, operand 1, single buffered']
    #allocation10 [shape = 's32[1]{0}', space=sflag, size = 0x4, scoped, tag = 'scoped memory for tpu_custom_call.1']
    %10 = vsyncpa [#allocation3], 0
    %11 = vsyncpa [#allocation6], 0
    %12 = vsyncpa [#allocation4], 0
    %13 = vsyncpa [#allocation10], 0
    // Predicated region
    $region2: #{tpu_custom_call.1} parent=1 // pred_check
      _
    $region3: #{tpu_custom_call.1} parent=1 // pred_check_branch
      %15 = sbr.rel (0) target = $region5
    $region4: #{tpu_custom_call.1} parent=1 // pred_region
      %s17 = ssub.s32 128, 128
      %18 = vsyncadd [#allocation3], %s17
      %s20 = sshll.u32 [#allocation2], 4
      %s21 = int_to_ptr.vmem [resolvable:$true] %s20
      %23 = dma.hbm_to_vmem [thread:$0]  %s0, 128, %s21, [#allocation3]
    $region5: #{tpu_custom_call.1} parent=1 // pred_fallthru
      _
    // Predicated region
    $region6: #{tpu_custom_call.1} parent=1 // pred_check
      _
    $region7: #{tpu_custom_call.1} parent=1 // pred_check_branch
      %25 = sbr.rel (0) target = $region9
    $region8: #{tpu_custom_call.1} parent=1 // pred_region
      %s27 = ssub.s32 256, 256
      %28 = vsyncadd [#allocation6], %s27
      %s29 = sshll.u32 [#allocation5], 4
      %s30 = int_to_ptr.vmem [resolvable:$true] %s29
      %35 = dma.hbm_to_vmem [thread:$0]  %s1, 256, %s30, [#allocation6], 128, 128, 8
    $region9: #{tpu_custom_call.1} parent=1 // pred_fallthru
      _
    // Predicated region
    $region10: #{tpu_custom_call.1} parent=1 // pred_check
      _
    $region11: #{tpu_custom_call.1} parent=1 // pred_check_branch
      %37 = sbr.rel (0) target = $region13
    $region12: #{tpu_custom_call.1} parent=1 // pred_region
      %s39 = ssub.s32 256, 256
      %40 = vsyncadd [#allocation6], %s39
      %s41 = sshll.u32 [#allocation7], 4
      %s42 = int_to_ptr.vmem [resolvable:$true] %s41
      %47 = dma.hbm_to_vmem [thread:$0]  %s2, 256, %s42, [#allocation6], 128, 128, 8
    $region13: #{tpu_custom_call.1} parent=1 // pred_fallthru
      _
    // Predicated region
    $region14: #{tpu_custom_call.1} parent=1 // pred_check
      _
    $region15: #{tpu_custom_call.1} parent=1 // pred_check_branch
      %49 = sbr.rel (0) target = $region17
    $region16: #{tpu_custom_call.1} parent=1 // pred_region
      %50 = dma.done [#allocation3], 128
    $region17: #{tpu_custom_call.1} parent=1 // pred_fallthru
      _
    // Predicated region
    $region18: #{tpu_custom_call.1} parent=1 // pred_check
      _
    $region19: #{tpu_custom_call.1} parent=1 // pred_check_branch
      %52 = sbr.rel (0) target = $region21
    $region20: #{tpu_custom_call.1} parent=1 // pred_region
      %53 = dma.done [#allocation6], 256
    $region21: #{tpu_custom_call.1} parent=1 // pred_fallthru
      _
    // Predicated region
    $region22: #{tpu_custom_call.1} parent=1 // pred_check
      _
    $region23: #{tpu_custom_call.1} parent=1 // pred_check_branch
      %55 = sbr.rel (0) target = $region25
    $region24: #{tpu_custom_call.1} parent=1 // pred_region
      %56 = dma.done [#allocation6], 256
    $region25: #{tpu_custom_call.1} parent=1 // pred_fallthru
      _
    %v57 = vld [vmem:[#allocation2] sm:$0xff]
    loop: start=0, step=1, limit=2
    $region26: #{tpu_custom_call.1} parent=1 // loop_pre_header
      _
    $region27: #{tpu_custom_call.1} parent=1 // loop_header
      %s59 = sphi 0, %s63
      %p60 = scmp.ge.s32.totalorder %s59, 2
      %v64 = vphi 0.0, %v77
      %v65 = vphi 0.0, %v78
    $region28: #{tpu_custom_call.1} parent=1 // loop_header_branch
      %62 = sbr.rel (%p60) target = $region32
    $region29: #{tpu_custom_call.1} parent=1 // loop_body
      %s66 = smul.u32 %s59, 8
      %s67 = scalar_lea.vmem [#allocation5], %s66
      %v68 = vld [vmem:[%s67] sm:$0xff]
      %s69 = scalar_lea.vmem [#allocation7], %s66
      %v70 = vld [vmem:[%s69] sm:$0xff]
      loop: start=0, step=1, limit=128
      $region33: #{tpu_custom_call.1} parent=29 // loop_pre_header
        _
      $region34: #{tpu_custom_call.1} parent=29 // loop_header
        %s72 = sphi 0, %s76
        %p73 = scmp.ge.s32.totalorder %s72, 128
        %v77 = vphi %v64, %v154
        %v78 = vphi %v65, %v158
        %v79 = vphi %v68, %v160
        %v80 = vphi %v70, %v162
      $region35: #{tpu_custom_call.1} parent=29 // loop_header_branch
        %75 = sbr.rel (%p73) target = $region39
      $region36: #{tpu_custom_call.1} parent=29 // loop_body
        %vm81 = vcmp.le.f32.partialorder %v79, %v57
        %v82 = vsel %vm81, 1, 0
        %v83 = vcvt.s32.f32 %v82
        %v84 = vadd.f32 %v77, %v83
        %vm85 = vcmp.le.f32.partialorder %v80, %v57
        %v86 = vsel %vm85, 1, 0
        %v87 = vcvt.s32.f32 %v86
        %v88 = vadd.f32 %v78, %v87
        %v89 = vrot.slane %v79, 7
        %v90 = vrot.slane %v80, 7
        %vm91 = vcmp.le.f32.partialorder %v89, %v57
        %v92 = vsel %vm91, 1, 0
        %v93 = vcvt.s32.f32 %v92
        %v94 = vadd.f32 %v84, %v93
        %vm95 = vcmp.le.f32.partialorder %v90, %v57
        %v96 = vsel %vm95, 1, 0
        %v97 = vcvt.s32.f32 %v96
        %v98 = vadd.f32 %v88, %v97
        %v99 = vrot.slane %v79, 6
        %v100 = vrot.slane %v80, 6
        %vm101 = vcmp.le.f32.partialorder %v99, %v57
        %v102 = vsel %vm101, 1, 0
        %v103 = vcvt.s32.f32 %v102
        %v104 = vadd.f32 %v94, %v103
        %vm105 = vcmp.le.f32.partialorder %v100, %v57
        %v106 = vsel %vm105, 1, 0
        %v107 = vcvt.s32.f32 %v106
        %v108 = vadd.f32 %v98, %v107
        %v109 = vrot.slane %v79, 5
        %v110 = vrot.slane %v80, 5
        %vm111 = vcmp.le.f32.partialorder %v109, %v57
        %v112 = vsel %vm111, 1, 0
        %v113 = vcvt.s32.f32 %v112
        %v114 = vadd.f32 %v104, %v113
        %vm115 = vcmp.le.f32.partialorder %v110, %v57
        %v116 = vsel %vm115, 1, 0
        %v117 = vcvt.s32.f32 %v116
        %v118 = vadd.f32 %v108, %v117
        %v119 = vrot.slane %v79, 4
        %v120 = vrot.slane %v80, 4
        %vm121 = vcmp.le.f32.partialorder %v119, %v57
        %v122 = vsel %vm121, 1, 0
        %v123 = vcvt.s32.f32 %v122
        %v124 = vadd.f32 %v114, %v123
        %vm125 = vcmp.le.f32.partialorder %v120, %v57
        %v126 = vsel %vm125, 1, 0
        %v127 = vcvt.s32.f32 %v126
        %v128 = vadd.f32 %v118, %v127
        %v129 = vrot.slane %v79, 3
        %v130 = vrot.slane %v80, 3
        %vm131 = vcmp.le.f32.partialorder %v129, %v57
        %v132 = vsel %vm131, 1, 0
        %v133 = vcvt.s32.f32 %v132
        %v134 = vadd.f32 %v124, %v133
        %vm135 = vcmp.le.f32.partialorder %v130, %v57
        %v136 = vsel %vm135, 1, 0
        %v137 = vcvt.s32.f32 %v136
        %v138 = vadd.f32 %v128, %v137
        %v139 = vrot.slane %v79, 2
        %v140 = vrot.slane %v80, 2
        %vm141 = vcmp.le.f32.partialorder %v139, %v57
        %v142 = vsel %vm141, 1, 0
        %v143 = vcvt.s32.f32 %v142
        %v144 = vadd.f32 %v134, %v143
        %vm145 = vcmp.le.f32.partialorder %v140, %v57
        %v146 = vsel %vm145, 1, 0
        %v147 = vcvt.s32.f32 %v146
        %v148 = vadd.f32 %v138, %v147
        %v149 = vrot.slane %v79, 1
        %v150 = vrot.slane %v80, 1
        %vm151 = vcmp.le.f32.partialorder %v149, %v57
        %v152 = vsel %vm151, 1, 0
        %v153 = vcvt.s32.f32 %v152
        %v154 = vadd.f32 %v144, %v153
        %vm155 = vcmp.le.f32.partialorder %v150, %v57
        %v156 = vsel %vm155, 1, 0
        %v157 = vcvt.s32.f32 %v156
        %v158 = vadd.f32 %v148, %v157
        %159 = vrot.lane.b32.xlu0 %v79, 1
        %v160 = vpop.permute.xlu0 %159
        %161 = vrot.lane.b32.xlu0 %v80, 1
        %v162 = vpop.permute.xlu0 %161
      $region37: #{tpu_custom_call.1} parent=29 // loop_footer
        %s76 = sadd.s32 1, %s72
      $region38: #{tpu_custom_call.1} parent=29 // loop_footer_branch
        %71 = sbr.rel target = $region34
      $region39: #{tpu_custom_call.1} parent=29 // loop_exit
        _
    $region30: #{tpu_custom_call.1} parent=1 // loop_footer
      %s63 = sadd.s32 1, %s59
    $region31: #{tpu_custom_call.1} parent=1 // loop_footer_branch
      %58 = sbr.rel target = $region27
    $region32: #{tpu_custom_call.1} parent=1 // loop_exit
      _
    %163 = vst [vmem:[#allocation8] sm:$0xff] %v64
    %164 = vst [vmem:[#allocation9] sm:$0xff] %v65
    // Predicated region
    $region40: #{tpu_custom_call.1} parent=1 // pred_check
      _
    $region41: #{tpu_custom_call.1} parent=1 // pred_check_branch
      %166 = sbr.rel (0) target = $region43
    $region42: #{tpu_custom_call.1} parent=1 // pred_region
      %s168 = ssub.s32 128, 128
      %169 = vsyncadd [#allocation4], %s168
      %s171 = sshll.u32 [#allocation8], 4
      %s172 = int_to_ptr.vmem [resolvable:$true] %s171
      %174 = dma.vmem_to_hbm [thread:$0]  %s172, 128, %s3, [#allocation4]
    $region43: #{tpu_custom_call.1} parent=1 // pred_fallthru
      _
    // Predicated region
    $region44: #{tpu_custom_call.1} parent=1 // pred_check
      _
    $region45: #{tpu_custom_call.1} parent=1 // pred_check_branch
      %176 = sbr.rel (0) target = $region47
    $region46: #{tpu_custom_call.1} parent=1 // pred_region
      %s178 = ssub.s32 128, 128
      %179 = vsyncadd [#allocation10], %s178
      %s181 = sshll.u32 [#allocation9], 4
      %s182 = int_to_ptr.vmem [resolvable:$true] %s181
      %184 = dma.vmem_to_hbm [thread:$0]  %s182, 128, %s4, [#allocation10]
    $region47: #{tpu_custom_call.1} parent=1 // pred_fallthru
      _
    // Predicated region
    $region48: #{tpu_custom_call.1} parent=1 // pred_check
      _
    $region49: #{tpu_custom_call.1} parent=1 // pred_check_branch
      %186 = sbr.rel (0) target = $region51
    $region50: #{tpu_custom_call.1} parent=1 // pred_region
      %187 = dma.done [#allocation4], 128
    $region51: #{tpu_custom_call.1} parent=1 // pred_fallthru
      _
    // Predicated region
    $region52: #{tpu_custom_call.1} parent=1 // pred_check
      _
    $region53: #{tpu_custom_call.1} parent=1 // pred_check_branch
      %189 = sbr.rel (0) target = $region55
    $region54: #{tpu_custom_call.1} parent=1 // pred_region
      %190 = dma.done [#allocation10], 128
    $region55: #{tpu_custom_call.1} parent=1 // pred_fallthru
      _
    %191 = vsyncpa [#allocation3], 1
    %192 = vsyncpa [#allocation6], 1
    %193 = vsyncpa [#allocation4], 1
    %194 = vsyncpa [#allocation10], 1

</llo_original>
